<compile_context>
chip_gen: v7x
topology: tpu7x:2x2x1
jax: 0.10.0
libtpu: 0.0.40
codegen_flags: <defaults>
</compile_context>

<pallas_src>
import functools
import math

import jax
import jax.numpy as jnp
from jax.experimental import pallas as pl
from jax.experimental.pallas import tpu as pltpu

_SQRT_HALF = 1.0 / math.sqrt(2.0)
_MIB = 2 ** 20


def _gelu_exact(x):
    # nn.GELU() default is the exact erf-based formulation (matches PyTorch).
    return 0.5 * x * (1.0 + jax.lax.erf(x * _SQRT_HALF))


def _round_up(n, m):
    return ((n + m - 1) // m) * m


def _cdiv(a, b):
    return (a + b - 1) // b


def _vmem_budget_bytes():
    """Physical VMEM capacity of this chip minus headroom (generation-aware)."""
    try:
        info = pltpu.get_tpu_info()
        cap = int(getattr(info, "vmem_capacity_bytes", 64 * _MIB))
    except Exception:
        cap = 64 * _MIB  # conservative (v7x-sized) default
    return max(cap - 8 * _MIB, 16 * _MIB)


# ---------------------------------------------------------------------------
# Kernels
# ---------------------------------------------------------------------------
def _mlp_kernel_resident(x_ref, wfc_ref, bfc_ref, wproj_ref, bproj_ref, o_ref,
                         *, chunks):
    """Fully-resident weights; static hidden-dim chunks so matmul1 / GELU /
    matmul2 of different chunks overlap (MXU vs VPU/EUP slots) and the live
    f32 intermediate stays (tm, th) instead of (tm, H)."""
    x = x_ref[...]
    acc = None
    for lo, sz in chunks:
        h = jnp.dot(x, wfc_ref[:, lo:lo + sz],
                    preferred_element_type=jnp.float32)
        h = _gelu_exact(h + bfc_ref[:, lo:lo + sz])          # f32 GELU
        p = jnp.dot(h.astype(wproj_ref.dtype), wproj_ref[lo:lo + sz, :],
                    preferred_element_type=jnp.float32)
        acc = p if acc is None else acc + p
    # dropout: identity in eval mode
    o_ref[...] = (acc + bproj_ref[...]).astype(o_ref.dtype)


def _mlp_kernel_stream(x_ref, wfc_ref, bfc_ref, wproj_ref, bproj_ref, o_ref,
                       acc_ref):
    """Streaming weights: grid axis 1 walks hidden-dim chunks ("arbitrary"
    reduction axis); partial products accumulate in an f32 VMEM scratch."""
    j = pl.program_id(1)

    @pl.when(j == 0)
    def _():
        acc_ref[...] = jnp.zeros_like(acc_ref)

    h = jnp.dot(x_ref[...], wfc_ref[...], preferred_element_type=jnp.float32)
    h = _gelu_exact(h + bfc_ref[...])
    acc_ref[...] += jnp.dot(h.astype(wproj_ref.dtype), wproj_ref[...],
                            preferred_element_type=jnp.float32)

    @pl.when(j == pl.num_programs(1) - 1)
    def _():
        # dropout: identity in eval mode
        o_ref[...] = (acc_ref[...] + bproj_ref[...]).astype(o_ref.dtype)


# ---------------------------------------------------------------------------
# pallas_call builders
# ---------------------------------------------------------------------------
def _build_resident(rows, C, H, tm, th, out_dtype, vmem_limit, cost,
                    single_buffer_weights):
    chunks = tuple((lo, min(th, H - lo)) for lo in range(0, H, th))
    kernel = functools.partial(_mlp_kernel_resident, chunks=chunks)
    # Constant-index (resident) blocks: request a single buffer so Pallas does
    # not double-buffer blocks whose index never changes.
    res_kw = dict(pipeline_mode=pl.Buffered(1)) if single_buffer_weights else {}
    in_specs = [
        pl.BlockSpec((tm, C), lambda i: (i, 0)),               # x row tile
        pl.BlockSpec((C, H), lambda i: (0, 0), **res_kw),      # W_fc (resident)
        pl.BlockSpec((1, H), lambda i: (0, 0), **res_kw),      # b_fc
        pl.BlockSpec((H, C), lambda i: (0, 0), **res_kw),      # W_proj (resident)
        pl.BlockSpec((1, C), lambda i: (0, 0), **res_kw),      # b_proj
    ]
    return pl.pallas_call(
        kernel,
        out_shape=jax.ShapeDtypeStruct((rows, C), out_dtype),
        grid_spec=pltpu.PrefetchScalarGridSpec(
            num_scalar_prefetch=0,
            grid=(_cdiv(rows, tm),),
            in_specs=in_specs,
            out_specs=pl.BlockSpec((tm, C), lambda i: (i, 0)),
        ),
        compiler_params=pltpu.CompilerParams(
            dimension_semantics=("parallel",),     # rows independent -> megacore
            vmem_limit_bytes=vmem_limit,
        ),
        cost_estimate=cost,
    )


def _build_stream(rows, C, H, tm, th, out_dtype, vmem_limit, cost):
    in_specs = [
        pl.BlockSpec((tm, C), lambda i, j: (i, 0)),   # x tile (constant in j)
        pl.BlockSpec((C, th), lambda i, j: (0, j)),   # W_fc column chunk
        pl.BlockSpec((1, th), lambda i, j: (0, j)),   # b_fc chunk
        pl.BlockSpec((th, C), lambda i, j: (j, 0)),   # W_proj row chunk
        pl.BlockSpec((1, C), lambda i, j: (0, 0)),    # b_proj
    ]
    return pl.pallas_call(
        _mlp_kernel_stream,
        out_shape=jax.ShapeDtypeStruct((rows, C), out_dtype),
        grid_spec=pltpu.PrefetchScalarGridSpec(
            num_scalar_prefetch=0,
            grid=(_cdiv(rows, tm), H // th),
            in_specs=in_specs,
            out_specs=pl.BlockSpec((tm, C), lambda i, j: (i, 0)),
            scratch_shapes=[pltpu.VMEM((tm, C), jnp.float32)],
        ),
        compiler_params=pltpu.CompilerParams(
            dimension_semantics=("parallel", "arbitrary"),
            vmem_limit_bytes=vmem_limit,
        ),
        cost_estimate=cost,
    )


# ---------------------------------------------------------------------------
# Wrapper
# ---------------------------------------------------------------------------
def prepare_mlp_params(w_fc, b_fc, w_proj, b_proj, compute_dtype=jnp.bfloat16):
    """Cast weights ONCE to the MXU compute dtype (store them this way) and
    biases to f32 (1, N) — avoids a per-call HBM convert pass."""
    wf = w_fc if w_fc.dtype == compute_dtype else w_fc.astype(compute_dtype)
    wp = w_proj if w_proj.dtype == compute_dtype else w_proj.astype(compute_dtype)
    bf = jnp.asarray(b_fc, jnp.float32).reshape(1, -1)
    bp = jnp.asarray(b_proj, jnp.float32).reshape(1, -1)
    return wf, bf, wp, bp


def mlp_pallas(x, w_fc, b_fc, w_proj, b_proj, *, out_dtype=None,
               compute_dtype=jnp.bfloat16, tm=None):
    """GPT MLP forward: dropout(c_proj(gelu(c_fc(x)))) in eval mode.

    x: (B, T, C). Weights are (in, out) = transpose of PyTorch's (out, in);
    pass them through prepare_mlp_params once to avoid per-call dtype casts.
    out_dtype defaults to x.dtype; pass jnp.bfloat16 when the downstream
    consumer accepts it to halve output writeback bytes.
    """
    B, T, C = x.shape
    H = w_fc.shape[1]
    rows = B * T
    out_dtype = x.dtype if out_dtype is None else jnp.dtype(out_dtype)

    # Cast only if the caller did not pre-cast.
    wf = w_fc if w_fc.dtype == compute_dtype else w_fc.astype(compute_dtype)
    wp = w_proj if w_proj.dtype == compute_dtype else w_proj.astype(compute_dtype)
    bf = jnp.asarray(b_fc, jnp.float32).reshape(1, H)
    bp = jnp.asarray(b_proj, jnp.float32).reshape(1, C)

    x2 = x.reshape(rows, C)
    if x2.dtype != compute_dtype:
        x2 = x2.astype(compute_dtype)

    act_b = jnp.dtype(compute_dtype).itemsize
    out_b = jnp.dtype(out_dtype).itemsize
    vmem_budget = _vmem_budget_bytes()

    # Row tile: MXU-sized; >=2 tiles when possible (v7x dual TensorCore); no
    # activation padding (Pallas masks the ragged last tile). 16-row alignment
    # for bf16 sublane packing.
    if tm is None:
        if rows <= 256:
            tm_eff = _round_up(rows, 16)
        elif rows <= 512:
            tm_eff = _round_up(_cdiv(rows, 2), 16)   # 2 tiles -> both TCs busy
        else:
            tm_eff = 512
    else:
        tm_eff = min(_round_up(tm, 16), _round_up(rows, 16))
    tm_eff = max(tm_eff, 16)

    flops = 4 * rows * C * H        # two (rows x C x H) matmuls
    trans = rows * H                # erf on the hidden activations

    # Mode selection: resident weights if they (plus tiles) fit this chip's VMEM.
    th_res = min(512, H)
    w_bytes = 2 * C * H * act_b     # both weight matrices, single-buffered
    resident_est = (w_bytes
                    + (H + C) * 4                         # f32 biases
                    + 2 * tm_eff * C * (act_b + out_b)    # x / out tiles (x2 buffers)
                    + 2 * tm_eff * (th_res + C) * 4)      # f32 chunk + acc (+headroom)

    out = None
    if resident_est <= vmem_budget:
        vmem_limit = int(min(vmem_budget, max(2 * resident_est, 32 * _MIB)))
        cost = pl.CostEstimate(
            flops=flops, transcendentals=trans,
            bytes_accessed=rows * C * (act_b + out_b) + w_bytes + (H + C) * 4)
        try:
            out = _build_resident(rows, C, H, tm_eff, th_res, out_dtype,
                                  vmem_limit, cost,
                                  single_buffer_weights=True)(x2, wf, bf, wp, bp)
        except Exception:
            # Fallback for JAX builds that reject pl.Buffered(1) on resident
            # blocks: re-derive the VMEM budget for double-buffered weights; if
            # that no longer fits, fall through to the streaming path instead.
            if resident_est + w_bytes <= vmem_budget:
                vmem_limit = int(min(vmem_budget,
                                     max(2 * (resident_est + w_bytes), 32 * _MIB)))
                out = _build_resident(rows, C, H, tm_eff, th_res, out_dtype,
                                      vmem_limit, cost,
                                      single_buffer_weights=False)(x2, wf, bf, wp, bp)

    if out is None:
        # Streaming mode: weights too big for VMEM (e.g. v7x 64 MiB at large
        # n_embd) -> H-split reduction grid axis + f32 scratch accumulator.
        th_s = H
        for cand in (512, 1024, 768, 384, 256, 128):
            if H % cand == 0:
                th_s = cand
                break
        tm_s = tm_eff

        def stream_est(tm_, th_):
            return (2 * 2 * C * th_ * act_b          # double-buffered W chunks
                    + 2 * th_ * 4 + C * 4            # bias chunk + b_proj
                    + 2 * tm_ * C * (act_b + out_b)  # x / out tiles
                    + tm_ * C * 4                    # f32 accumulator scratch
                    + 2 * tm_ * th_ * 4)             # f32 hidden chunk (+headroom)

        while (stream_est(tm_s, th_s) > vmem_budget and th_s > 128
               and (th_s // 2) % 128 == 0 and H % (th_s // 2) == 0):
            th_s //= 2
        while stream_est(tm_s, th_s) > vmem_budget and tm_s > 128:
            tm_s = _round_up(tm_s // 2, 16)
        # TODO(synk): if even (tm=128, th=128) overflows the budget (exotic
        # shapes) the call relies on the compiler's own VMEM management.

        n_row_tiles = _cdiv(rows, tm_s)
        vmem_limit = int(min(vmem_budget,
                             max(2 * stream_est(tm_s, th_s), 32 * _MIB)))
        cost = pl.CostEstimate(
            flops=flops, transcendentals=trans,
            bytes_accessed=(rows * C * (act_b + out_b)
                            + n_row_tiles * (w_bytes + (H + C) * 4)))
        out = _build_stream(rows, C, H, tm_s, th_s, out_dtype,
                            vmem_limit, cost)(x2, wf, bf, wp, bp)

    return out.reshape(B, T, C)


def init_params(key, n_embd, dtype=jnp.float32):
    """Deterministic init mimicking nn.Linear defaults (uniform +-1/sqrt(fan_in)).
    Weights stored as (in, out) = transpose of PyTorch's (out, in)."""
    H = 4 * n_embd
    k1, k2, k3, k4 = jax.random.split(key, 4)
    lim_fc = 1.0 / math.sqrt(n_embd)
    lim_pr = 1.0 / math.sqrt(H)
    w_fc = jax.random.uniform(k1, (n_embd, H), dtype, -lim_fc, lim_fc)
    b_fc = jax.random.uniform(k2, (H,), dtype, -lim_fc, lim_fc)
    w_proj = jax.random.uniform(k3, (H, n_embd), dtype, -lim_pr, lim_pr)
    b_proj = jax.random.uniform(k4, (n_embd,), dtype, -lim_pr, lim_pr)
    return w_fc, b_fc, w_proj, b_proj


def _ref_bf16(x, w_fc, b_fc, w_proj, b_proj):
    """Plain-JAX reference mirroring the kernel's bf16-MXU / f32-accumulate path."""
    B, T, C = x.shape
    xb = x.reshape(-1, C).astype(jnp.bfloat16)
    h = jnp.dot(xb, w_fc.astype(jnp.bfloat16),
                preferred_element_type=jnp.float32) + b_fc.reshape(1, -1)
    h = 0.5 * h * (1.0 + jax.lax.erf(h * _SQRT_HALF))
    y = (jnp.dot(h.astype(jnp.bfloat16), w_proj.astype(jnp.bfloat16),
                 preferred_element_type=jnp.float32) + b_proj.reshape(1, -1))
    return y.reshape(B, T, -1)


if __name__ == "__main__":
    # Small GPT-MLP config: batch=2, seq=8, n_embd=32 -> hidden=128.
    B, T, C = 2, 8, 32
    key = jax.random.PRNGKey(0)
    kx, kp, kx2 = jax.random.split(key, 3)
    x = jax.random.normal(kx, (B, T, C), jnp.float32)
    w_fc, b_fc, w_proj, b_proj = init_params(kp, C)

    # Cast weights to bf16 ONCE (persistent); per-call wrapper won't re-cast.
    wf, bf, wp, bp = prepare_mlp_params(w_fc, b_fc, w_proj, b_proj)

    y = mlp_pallas(x, wf, bf, wp, bp)
    jax.block_until_ready(y)

    y_ref = _ref_bf16(x, w_fc, b_fc, w_proj, b_proj)
    assert y.shape == (B, T, C)
    assert jnp.allclose(y, y_ref, atol=2e-2, rtol=2e-2), "mismatch vs bf16 reference"

    # Loose sanity check against the pure-f32 reference (bf16 error budget).
    h32 = x.reshape(-1, C) @ w_fc + b_fc
    h32 = 0.5 * h32 * (1.0 + jax.lax.erf(h32 * _SQRT_HALF))
    y32 = (h32 @ w_proj + b_proj).reshape(B, T, C)
    assert jnp.allclose(y, y32, atol=1e-1, rtol=1e-1), "mismatch vs f32 reference"

    # Second config exercising multiple row tiles + ragged last tile masking.
    B2, T2 = 3, 100           # rows = 300 -> two row tiles, last one ragged
    x2 = jax.random.normal(kx2, (B2, T2, C), jnp.float32)
    y2 = mlp_pallas(x2, wf, bf, wp, bp)
    jax.block_until_ready(y2)
    y2_ref = _ref_bf16(x2, w_fc, b_fc, w_proj, b_proj)
    assert jnp.allclose(y2, y2_ref, atol=2e-2, rtol=2e-2), "ragged-tile mismatch"

    print("KERNEL_OK")
</pallas_src>

<mosaic_0001>
module attributes {stable_mosaic.version = 11 : i64} {
  func.func @_mlp_kernel_resident(%arg0: i32, %arg1: memref<16x32xbf16, #tpu.memory_space<vmem>>, %arg2: memref<32x128xbf16, #tpu.memory_space<vmem>>, %arg3: memref<1x128xf32, #tpu.memory_space<vmem>>, %arg4: memref<128x32xbf16, #tpu.memory_space<vmem>>, %arg5: memref<1x32xf32, #tpu.memory_space<vmem>>, %arg6: memref<16x32xf32, #tpu.memory_space<vmem>>) attributes {dimension_semantics = [#tpu.dimension_semantics<parallel>], iteration_bounds = array<i64: 1>, scalar_prefetch = 0 : i64, scratch_operands = 0 : i64, tpu.core_type = #tpu.core_type<tc>, window_params = [{transform_indices = @transform_0, window_bounds = array<i64: 16, 32>}, {pipeline_mode = #tpu.pipeline_mode<synchronous>, transform_indices = @transform_1, window_bounds = array<i64: 32, 128>}, {pipeline_mode = #tpu.pipeline_mode<synchronous>, transform_indices = @transform_2, window_bounds = array<i64: 1, 128>}, {pipeline_mode = #tpu.pipeline_mode<synchronous>, transform_indices = @transform_3, window_bounds = array<i64: 128, 32>}, {pipeline_mode = #tpu.pipeline_mode<synchronous>, transform_indices = @transform_4, window_bounds = array<i64: 1, 32>}, {transform_indices = @transform_5, window_bounds = array<i64: 16, 32>}]} {
    %c0 = arith.constant 0 : index
    %c0_0 = arith.constant 0 : index
    %0 = vector.load %arg1[%c0, %c0_0] : memref<16x32xbf16, #tpu.memory_space<vmem>>, vector<16x32xbf16>
    %c0_1 = arith.constant 0 : index
    %c0_2 = arith.constant 0 : index
    %1 = vector.load %arg2[%c0_1, %c0_2] : memref<32x128xbf16, #tpu.memory_space<vmem>>, vector<32x128xbf16>
    %cst = arith.constant dense<0.000000e+00> : vector<16x128xf32>
    %2 = tpu.matmul %0, %1, %cst {dimension_numbers = #tpu.dot_dimension_numbers<[1], [0], [0], [1], [0, 0, 1, 1], [], []>} : vector<16x32xbf16>, vector<32x128xbf16>, vector<16x128xf32> -> vector<16x128xf32>
    %c0_3 = arith.constant 0 : index
    %c0_4 = arith.constant 0 : index
    %3 = vector.load %arg3[%c0_3, %c0_4] : memref<1x128xf32, #tpu.memory_space<vmem>>, vector<1x128xf32>
    %4 = vector.broadcast %3 : vector<1x128xf32> to vector<16x128xf32>
    %5 = arith.addf %2, %4 : vector<16x128xf32>
    %cst_5 = arith.constant 5.000000e-01 : f32
    %6 = vector.broadcast %cst_5 : f32 to vector<16x128xf32>
    %7 = arith.mulf %6, %5 : vector<16x128xf32>
    %cst_6 = arith.constant 0.707106769 : f32
    %8 = vector.broadcast %cst_6 : f32 to vector<16x128xf32>
    %9 = arith.mulf %5, %8 : vector<16x128xf32>
    %10 = math.erf %9 : vector<16x128xf32>
    %cst_7 = arith.constant 1.000000e+00 : f32
    %11 = vector.broadcast %cst_7 : f32 to vector<16x128xf32>
    %12 = arith.addf %11, %10 : vector<16x128xf32>
    %13 = arith.mulf %7, %12 : vector<16x128xf32>
    %14 = arith.truncf %13 : vector<16x128xf32> to vector<16x128xbf16>
    %c0_8 = arith.constant 0 : index
    %c0_9 = arith.constant 0 : index
    %15 = vector.load %arg4[%c0_8, %c0_9] : memref<128x32xbf16, #tpu.memory_space<vmem>>, vector<128x32xbf16>
    %cst_10 = arith.constant dense<0.000000e+00> : vector<16x32xf32>
    %16 = tpu.matmul %14, %15, %cst_10 {dimension_numbers = #tpu.dot_dimension_numbers<[1], [0], [0], [1], [0, 0, 1, 1], [], []>} : vector<16x128xbf16>, vector<128x32xbf16>, vector<16x32xf32> -> vector<16x32xf32>
    %c0_11 = arith.constant 0 : index
    %c0_12 = arith.constant 0 : index
    %17 = vector.load %arg5[%c0_11, %c0_12] : memref<1x32xf32, #tpu.memory_space<vmem>>, vector<1x32xf32>
    %18 = vector.broadcast %17 : vector<1x32xf32> to vector<16x32xf32>
    %19 = arith.addf %16, %18 : vector<16x32xf32>
    %c0_13 = arith.constant 0 : index
    %c0_14 = arith.constant 0 : index
    %20 = vector.load %arg6[%c0_13, %c0_14] : memref<16x32xf32, #tpu.memory_space<vmem>>, vector<16x32xf32>
    tpu.vector_store %arg6[%c0_13, %c0_14], %19 {strides = array<i32>} : memref<16x32xf32, #tpu.memory_space<vmem>>, vector<16x32xf32>,
    return
  }
  func.func @transform_0(%arg0: i32) -> (i32, i32) {
    %c0_i32 = arith.constant 0 : i32
    %c0_i32_0 = arith.constant 0 : i32
    return %arg0, %c0_i32 : i32, i32
  }
  func.func @transform_1(%arg0: i32) -> (i32, i32) {
    %c0_i32 = arith.constant 0 : i32
    %c0_i32_0 = arith.constant 0 : i32
    %c0_i32_1 = arith.constant 0 : i32
    return %c0_i32, %c0_i32_0 : i32, i32
  }
  func.func @transform_2(%arg0: i32) -> (i32, i32) {
    %c0_i32 = arith.constant 0 : i32
    %c0_i32_0 = arith.constant 0 : i32
    %c0_i32_1 = arith.constant 0 : i32
    return %c0_i32, %c0_i32_0 : i32, i32
  }
  func.func @transform_3(%arg0: i32) -> (i32, i32) {
    %c0_i32 = arith.constant 0 : i32
    %c0_i32_0 = arith.constant 0 : i32
    %c0_i32_1 = arith.constant 0 : i32
    return %c0_i32, %c0_i32_0 : i32, i32
  }
  func.func @transform_4(%arg0: i32) -> (i32, i32) {
    %c0_i32 = arith.constant 0 : i32
    %c0_i32_0 = arith.constant 0 : i32
    %c0_i32_1 = arith.constant 0 : i32
    return %c0_i32, %c0_i32_0 : i32, i32
  }
  func.func @transform_5(%arg0: i32) -> (i32, i32) {
    %c0_i32 = arith.constant 0 : i32
    %c0_i32_0 = arith.constant 0 : i32
    return %arg0, %c0_i32 : i32, i32
  }
}

module attributes {stable_mosaic.version = 11 : i64} {
  func.func @_mlp_kernel_resident(%arg0: i32, %arg1: memref<16x32xbf16, #tpu.memory_space<vmem>>, %arg2: memref<32x128xbf16, #tpu.memory_space<vmem>>, %arg3: memref<1x128xf32, #tpu.memory_space<vmem>>, %arg4: memref<128x32xbf16, #tpu.memory_space<vmem>>, %arg5: memref<1x32xf32, #tpu.memory_space<vmem>>, %arg6: memref<16x32xf32, #tpu.memory_space<vmem>>) attributes {dimension_semantics = [#tpu.dimension_semantics<parallel>], iteration_bounds = array<i64: 1>, scalar_prefetch = 0 : i64, scratch_operands = 0 : i64, tpu.core_type = #tpu.core_type<tc>, window_params = [{transform_indices = @transform_0, window_bounds = array<i64: 16, 32>}, {pipeline_mode = #tpu.pipeline_mode<synchronous>, transform_indices = @transform_1, window_bounds = array<i64: 32, 128>}, {pipeline_mode = #tpu.pipeline_mode<synchronous>, transform_indices = @transform_2, window_bounds = array<i64: 1, 128>}, {pipeline_mode = #tpu.pipeline_mode<synchronous>, transform_indices = @transform_3, window_bounds = array<i64: 128, 32>}, {pipeline_mode = #tpu.pipeline_mode<synchronous>, transform_indices = @transform_4, window_bounds = array<i64: 1, 32>}, {transform_indices = @transform_5, window_bounds = array<i64: 16, 32>}]} {
    %c0 = arith.constant 0 : index
    %c0_0 = arith.constant 0 : index
    %0 = vector.load %arg1[%c0, %c0_0] : memref<16x32xbf16, #tpu.memory_space<vmem>>, vector<16x32xbf16>
    %c0_1 = arith.constant 0 : index
    %c0_2 = arith.constant 0 : index
    %1 = vector.load %arg2[%c0_1, %c0_2] : memref<32x128xbf16, #tpu.memory_space<vmem>>, vector<32x128xbf16>
    %cst = arith.constant dense<0.000000e+00> : vector<16x128xf32>
    %2 = tpu.matmul %0, %1, %cst {dimension_numbers = #tpu.dot_dimension_numbers<[1], [0], [0], [1], [0, 0, 1, 1], [], []>} : vector<16x32xbf16>, vector<32x128xbf16>, vector<16x128xf32> -> vector<16x128xf32>
    %c0_3 = arith.constant 0 : index
    %c0_4 = arith.constant 0 : index
    %3 = vector.load %arg3[%c0_3, %c0_4] : memref<1x128xf32, #tpu.memory_space<vmem>>, vector<1x128xf32>
    %4 = vector.broadcast %3 : vector<1x128xf32> to vector<16x128xf32>
    %5 = arith.addf %2, %4 : vector<16x128xf32>
    %cst_5 = arith.constant 5.000000e-01 : f32
    %6 = vector.broadcast %cst_5 : f32 to vector<16x128xf32>
    %7 = arith.mulf %6, %5 : vector<16x128xf32>
    %cst_6 = arith.constant 0.707106769 : f32
    %8 = vector.broadcast %cst_6 : f32 to vector<16x128xf32>
    %9 = arith.mulf %5, %8 : vector<16x128xf32>
    %10 = math.erf %9 : vector<16x128xf32>
    %cst_7 = arith.constant 1.000000e+00 : f32
    %11 = vector.broadcast %cst_7 : f32 to vector<16x128xf32>
    %12 = arith.addf %11, %10 : vector<16x128xf32>
    %13 = arith.mulf %7, %12 : vector<16x128xf32>
    %14 = arith.truncf %13 : vector<16x128xf32> to vector<16x128xbf16>
    %c0_8 = arith.constant 0 : index
    %c0_9 = arith.constant 0 : index
    %15 = vector.load %arg4[%c0_8, %c0_9] : memref<128x32xbf16, #tpu.memory_space<vmem>>, vector<128x32xbf16>
    %cst_10 = arith.constant dense<0.000000e+00> : vector<16x32xf32>
    %16 = tpu.matmul %14, %15, %cst_10 {dimension_numbers = #tpu.dot_dimension_numbers<[1], [0], [0], [1], [0, 0, 1, 1], [], []>} : vector<16x128xbf16>, vector<128x32xbf16>, vector<16x32xf32> -> vector<16x32xf32>
    %c0_11 = arith.constant 0 : index
    %c0_12 = arith.constant 0 : index
    %17 = vector.load %arg5[%c0_11, %c0_12] : memref<1x32xf32, #tpu.memory_space<vmem>>, vector<1x32xf32>
    %18 = vector.broadcast %17 : vector<1x32xf32> to vector<16x32xf32>
    %19 = arith.addf %16, %18 : vector<16x32xf32>
    %c0_13 = arith.constant 0 : index
    %c0_14 = arith.constant 0 : index
    %20 = vector.load %arg6[%c0_13, %c0_14] : memref<16x32xf32, #tpu.memory_space<vmem>>, vector<16x32xf32>
    tpu.vector_store %arg6[%c0_13, %c0_14], %19 {strides = array<i32>} : memref<16x32xf32, #tpu.memory_space<vmem>>, vector<16x32xf32>,
    return
  }
  func.func @transform_0(%arg0: i32) -> (i32, i32) {
    %c0_i32 = arith.constant 0 : i32
    %c0_i32_0 = arith.constant 0 : i32
    return %arg0, %c0_i32 : i32, i32
  }
  func.func @transform_1(%arg0: i32) -> (i32, i32) {
    %c0_i32 = arith.constant 0 : i32
    %c0_i32_0 = arith.constant 0 : i32
    %c0_i32_1 = arith.constant 0 : i32
    return %c0_i32, %c0_i32_0 : i32, i32
  }
  func.func @transform_2(%arg0: i32) -> (i32, i32) {
    %c0_i32 = arith.constant 0 : i32
    %c0_i32_0 = arith.constant 0 : i32
    %c0_i32_1 = arith.constant 0 : i32
    return %c0_i32, %c0_i32_0 : i32, i32
  }
  func.func @transform_3(%arg0: i32) -> (i32, i32) {
    %c0_i32 = arith.constant 0 : i32
    %c0_i32_0 = arith.constant 0 : i32
    %c0_i32_1 = arith.constant 0 : i32
    return %c0_i32, %c0_i32_0 : i32, i32
  }
  func.func @transform_4(%arg0: i32) -> (i32, i32) {
    %c0_i32 = arith.constant 0 : i32
    %c0_i32_0 = arith.constant 0 : i32
    %c0_i32_1 = arith.constant 0 : i32
    return %c0_i32, %c0_i32_0 : i32, i32
  }
  func.func @transform_5(%arg0: i32) -> (i32, i32) {
    %c0_i32 = arith.constant 0 : i32
    %c0_i32_0 = arith.constant 0 : i32
    return %arg0, %c0_i32 : i32, i32
  }
}

</mosaic_0001>

<llo_original>
// kernel: tpu_custom_call.1
$region0: #{tpu_custom_call.1}
  #allocation0 [shape = 'u32[]', space=smem, size = 0x4, offset = 0x4, fixed_abs, tag = 'smem constant byte address 0x4 - core index']
  #allocation1 [shape = 'u32[144,128]{1,0:T(1,128)}', space=vmem, size = 0x12000, scoped, tag = 'internal scratch']
  %s0 = inlined_call_operand.vmem [shape: bf16[16,32], index: 0, kind: input, shape index: {}]
  %s1 = inlined_call_operand.vmem [shape: bf16[32,128], index: 1, kind: input, shape index: {}]
  %s2 = inlined_call_operand.vmem [shape: f32[1,128], index: 2, kind: input, shape index: {}]
  %s3 = inlined_call_operand.vmem [shape: bf16[128,32], index: 3, kind: input, shape index: {}]
  %s4 = inlined_call_operand.vmem [shape: f32[1,32], index: 4, kind: input, shape index: {}]
  %s5 = inlined_call_operand.hbm [shape: f32[16,32], index: 5, kind: output, shape index: {}]
  %s6 = sld [smem:[#allocation0]]
  $region30: #{tpu_custom_call.1} parent=0
    _
  %s8 = ssub.s32 1, %s6
  %s9 = scalar_select 0, %s8, %s6
  $region1: #{tpu_custom_call.1} parent=0
    #allocation2 [shape = 'u8[8192]{0}', space=vmem, size = 0x2000, scoped, tag = 'output window, operand 0, single buffered']
    #allocation3 [shape = 's32[1]{0}', space=sflag, size = 0x4, scoped, tag = 'scoped memory for tpu_custom_call.1']
    %10 = vsyncpa [#allocation3], 0
    // Predicated region
    $region2: #{tpu_custom_call.1} parent=1 // pred_check
      _
    $region3: #{tpu_custom_call.1} parent=1 // pred_check_branch
      %12 = sbr.rel (0) target = $region5
    $region4: #{tpu_custom_call.1} parent=1 // pred_region
      _
    $region5: #{tpu_custom_call.1} parent=1 // pred_fallthru
      _
    // Predicated region
    $region6: #{tpu_custom_call.1} parent=1 // pred_check
      _
    $region7: #{tpu_custom_call.1} parent=1 // pred_check_branch
      %14 = sbr.rel (0) target = $region9
    $region8: #{tpu_custom_call.1} parent=1 // pred_region
      _
    $region9: #{tpu_custom_call.1} parent=1 // pred_fallthru
      _
    // Predicated region
    $region10: #{tpu_custom_call.1} parent=1 // pred_check
      _
    $region11: #{tpu_custom_call.1} parent=1 // pred_check_branch
      %16 = sbr.rel (0) target = $region13
    $region12: #{tpu_custom_call.1} parent=1 // pred_region
      _
    $region13: #{tpu_custom_call.1} parent=1 // pred_fallthru
      _
    // Predicated region
    $region14: #{tpu_custom_call.1} parent=1 // pred_check
      _
    $region15: #{tpu_custom_call.1} parent=1 // pred_check_branch
      %18 = sbr.rel (0) target = $region17
    $region16: #{tpu_custom_call.1} parent=1 // pred_region
      _
    $region17: #{tpu_custom_call.1} parent=1 // pred_fallthru
      _
    // Predicated region
    $region18: #{tpu_custom_call.1} parent=1 // pred_check
      _
    $region19: #{tpu_custom_call.1} parent=1 // pred_check_branch
      %20 = sbr.rel (0) target = $region21
    $region20: #{tpu_custom_call.1} parent=1 // pred_region
      _
    $region21: #{tpu_custom_call.1} parent=1 // pred_fallthru
      _
    %v22 = vld [vmem:[%s0] sm:$0xf]
    %v23 = vld [vmem:[%s0 + $0x4] sm:$0xf]
    %v24 = vld [vmem:[%s1] sm:$0xf]
    %v25 = vld [vmem:[%s1 + $0x4] sm:$0xf]
    %v26 = vld [vmem:[%s1 + $0x8] sm:$0xf]
    %v27 = vld [vmem:[%s1 + $0xc] sm:$0xf]
    %v28 = vld [vmem:[%s2] sm:$0x1]
    %v30 = vlaneseq
    %v31 = vshrl.u32 %v30, 7
    %v32 = vsub.s32 0, %v31
    %v33 = vrot.slane %v28, %v32
    %v37 = vunpack.c.l.b16 %v22
    %v38 = vunpack.c.l.b16 %v23
    %v39 = vpack.c.b16 %v38, %v37
    %v44 = vunpack.c.l.b16 %v24
    %v45 = vunpack.c.l.b16 %v25
    %v46 = vunpack.c.l.b16 %v26
    %v47 = vunpack.c.l.b16 %v27
    %v48 = vpack.c.b16 %v45, %v44
    %v49 = vpack.c.b16 %v47, %v46
    %vm52 = vcmask 261120
    %v54 = vsel %vm52, %v39, 0
    %56 = vmatprep.subr.bf16.mxu0 0
    %57 = vmatpush1.bf16.msra.mxu0 %v48
    %58 = vmatprep.subr.bf16.mxu0 0
    %59 = vmatpush1.bf16.msra.mxu0 %v49
    %60 = vmatprep.subr.bf16.mxu0 0
    %61 = vmatpush1.bf16.msra.mxu0 0
    %62 = vmatprep.subr.bf16.mxu0 0
    %63 = vmatpush1.bf16.msra.mxu0 0
    %64 = vmatprep.subr.bf16.mxu0 0
    %65 = vmatpush1.bf16.msra.mxu0 0
    %66 = vmatprep.subr.bf16.mxu0 0
    %67 = vmatpush1.bf16.msra.mxu0 0
    %68 = vmatprep.subr.bf16.mxu0 0
    %69 = vmatpush1.bf16.msra.mxu0 0
    %70 = vmatprep.subr.bf16.mxu0 0
    %71 = vmatpush1.bf16.msra.mxu0 0
    %72 = vmatprep.subr.bf16.mxu0 0
    %73 = vmatpush1.bf16.msra.mxu0 0
    %74 = vmatprep.subr.bf16.mxu0 0
    %75 = vmatpush1.bf16.msra.mxu0 0
    %76 = vmatprep.subr.bf16.mxu0 0
    %77 = vmatpush1.bf16.msra.mxu0 0
    %78 = vmatprep.subr.bf16.mxu0 0
    %79 = vmatpush1.bf16.msra.mxu0 0
    %80 = vmatprep.subr.bf16.mxu0 0
    %81 = vmatpush1.bf16.msra.mxu0 0
    %82 = vmatprep.subr.bf16.mxu0 0
    %83 = vmatpush1.bf16.msra.mxu0 0
    %84 = vmatprep.subr.bf16.mxu0 0
    %85 = vmatpush1.bf16.msra.mxu0 0
    %86 = vmatprep.subr.bf16.mxu0 0
    %87 = vmatpush1.bf16.msra.mxu0 0
    %88 = vmatprep.mubr.bf16.mxu0 0
    %89 = vmatmul.mubr.bf16.gmra.mrb[0].mxu0 %v54
    %v90 = vpop.f32.mrb[0].mxu0
    %v91 = vadd.f32 %v33, %v90
    %v92 = vpop.f32.mrb[0].mxu0
    %v93 = vpop.f32.mrb[0].mxu0
    %v94 = vadd.f32 %v33, %v93
    %v95 = vpop.f32.mrb[0].mxu0
    %96 = vdwg.mxu0
    %v97 = vmul.f32 %v91, 0.5
    %v98 = vmul.f32 %v94, 0.5
    %v99 = vmul.f32 %v91, 0.70710677
    %v100 = vmul.f32 %v94, 0.70710677
    %v101 = verf.f32.pop %v99
    %v102 = verf.f32.pop %v100
    %v103 = vadd.f32 %v101, 1.0
    %v104 = vadd.f32 %v102, 1.0
    %v105 = vmul.f32 %v97, %v103
    %v106 = vmul.f32 %v98, %v104
    %v107 = vpack.c.bf16 %v106, %v105
    %v108 = vld [vmem:[%s3] sm:$0xf]
    %v109 = vld [vmem:[%s3 + $0x4] sm:$0xf]
    %v110 = vld [vmem:[%s3 + $0x8] sm:$0xf]
    %v111 = vld [vmem:[%s3 + $0xc] sm:$0xf]
    %v112 = vld [vmem:[%s3 + $0x10] sm:$0xf]
    %v113 = vld [vmem:[%s3 + $0x14] sm:$0xf]
    %v114 = vld [vmem:[%s3 + $0x18] sm:$0xf]
    %v115 = vld [vmem:[%s3 + $0x1c] sm:$0xf]
    %v116 = vld [vmem:[%s3 + $0x20] sm:$0xf]
    %v117 = vld [vmem:[%s3 + $0x24] sm:$0xf]
    %v118 = vld [vmem:[%s3 + $0x28] sm:$0xf]
    %v119 = vld [vmem:[%s3 + $0x2c] sm:$0xf]
    %v120 = vld [vmem:[%s3 + $0x30] sm:$0xf]
    %v121 = vld [vmem:[%s3 + $0x34] sm:$0xf]
    %v122 = vld [vmem:[%s3 + $0x38] sm:$0xf]
    %v123 = vld [vmem:[%s3 + $0x3c] sm:$0xf]
    %v124 = vld [vmem:[%s4] sm:$0x1]
    %v126 = vlaneseq
    %v127 = vshrl.u32 %v126, 7
    %v128 = vsub.s32 0, %v127
    %v129 = vrot.slane %v124, %v128
    %v147 = vunpack.c.l.b16 %v108
    %v148 = vunpack.c.l.b16 %v109
    %v149 = vunpack.c.l.b16 %v110
    %v150 = vunpack.c.l.b16 %v111
    %v151 = vunpack.c.l.b16 %v112
    %v152 = vunpack.c.l.b16 %v113
    %v153 = vunpack.c.l.b16 %v114
    %v154 = vunpack.c.l.b16 %v115
    %v155 = vunpack.c.l.b16 %v116
    %v156 = vunpack.c.l.b16 %v117
    %v157 = vunpack.c.l.b16 %v118
    %v158 = vunpack.c.l.b16 %v119
    %v159 = vunpack.c.l.b16 %v120
    %v160 = vunpack.c.l.b16 %v121
    %v161 = vunpack.c.l.b16 %v122
    %v162 = vunpack.c.l.b16 %v123
    %v163 = vpack.c.b16 %v148, %v147
    %v164 = vpack.c.b16 %v150, %v149
    %v165 = vpack.c.b16 %v152, %v151
    %v166 = vpack.c.b16 %v154, %v153
    %v167 = vpack.c.b16 %v156, %v155
    %v168 = vpack.c.b16 %v158, %v157
    %v169 = vpack.c.b16 %v160, %v159
    %v170 = vpack.c.b16 %v162, %v161
    %179 = vmatprep.subr.bf16.mxu0 0
    %180 = vmatpush1.bf16.msra.mxu0 %v163
    %181 = vmatprep.subr.bf16.mxu0 0
    %182 = vmatpush1.bf16.msra.mxu0 %v164
    %183 = vmatprep.subr.bf16.mxu0 0
    %184 = vmatpush1.bf16.msra.mxu0 %v165
    %185 = vmatprep.subr.bf16.mxu0 0
    %186 = vmatpush1.bf16.msra.mxu0 %v166
    %187 = vmatprep.subr.bf16.mxu0 0
    %188 = vmatpush1.bf16.msra.mxu0 %v167
    %189 = vmatprep.subr.bf16.mxu0 0
    %190 = vmatpush1.bf16.msra.mxu0 %v168
    %191 = vmatprep.subr.bf16.mxu0 0
    %192 = vmatpush1.bf16.msra.mxu0 %v169
    %193 = vmatprep.subr.bf16.mxu0 0
    %194 = vmatpush1.bf16.msra.mxu0 %v170
    %195 = vmatprep.subr.bf16.mxu0 0
    %196 = vmatpush1.bf16.msra.mxu0 0
    %197 = vmatprep.subr.bf16.mxu0 0
    %198 = vmatpush1.bf16.msra.mxu0 0
    %199 = vmatprep.subr.bf16.mxu0 0
    %200 = vmatpush1.bf16.msra.mxu0 0
    %201 = vmatprep.subr.bf16.mxu0 0
    %202 = vmatpush1.bf16.msra.mxu0 0
    %203 = vmatprep.subr.bf16.mxu0 0
    %204 = vmatpush1.bf16.msra.mxu0 0
    %205 = vmatprep.subr.bf16.mxu0 0
    %206 = vmatpush1.bf16.msra.mxu0 0
    %207 = vmatprep.subr.bf16.mxu0 0
    %208 = vmatpush1.bf16.msra.mxu0 0
    %209 = vmatprep.subr.bf16.mxu0 0
    %210 = vmatpush1.bf16.msra.mxu0 0
    %211 = vmatprep.mubr.bf16.mxu0 0
    %212 = vmatmul.mubr.bf16.gmra.mrb[0].mxu0 %v107
    %v213 = vpop.f32.mrb[0].mxu0
    %v214 = vadd.f32 %v129, %v213
    %v215 = vpop.f32.mrb[0].mxu0
    %v216 = vpop.f32.mrb[0].mxu0
    %v217 = vadd.f32 %v129, %v216
    %v218 = vpop.f32.mrb[0].mxu0
    %219 = vdwg.mxu0
    %220 = vst.msk [vmem:[#allocation2] sm:$0xff] %vm52, %v214
    %221 = vst.msk [vmem:[#allocation2 + $0x8] sm:$0xff] %vm52, %v217
    // Predicated region
    $region22: #{tpu_custom_call.1} parent=1 // pred_check
      _
    $region23: #{tpu_custom_call.1} parent=1 // pred_check_branch
      %223 = sbr.rel (0) target = $region25
    $region24: #{tpu_custom_call.1} parent=1 // pred_region
      %s225 = ssub.s32 256, 256
      %226 = vsyncadd [#allocation3], %s225
      %s227 = sshll.u32 [#allocation2], 4
      %s228 = int_to_ptr.vmem [resolvable:$true] %s227
      %233 = dma.vmem_to_hbm [thread:$0]  %s228, 256, %s5, [#allocation3], 128, 128, 8
    $region25: #{tpu_custom_call.1} parent=1 // pred_fallthru
      _
    // Predicated region
    $region26: #{tpu_custom_call.1} parent=1 // pred_check
      _
    $region27: #{tpu_custom_call.1} parent=1 // pred_check_branch
      %235 = sbr.rel (0) target = $region29
    $region28: #{tpu_custom_call.1} parent=1 // pred_region
      %236 = dma.done [#allocation3], 256
    $region29: #{tpu_custom_call.1} parent=1 // pred_fallthru
      _
    %237 = vsyncpa [#allocation3], 1

// kernel: tpu_custom_call.1
$region0: #{tpu_custom_call.1}
  #allocation0 [shape = 'u32[]', space=smem, size = 0x4, offset = 0x4, fixed_abs, tag = 'smem constant byte address 0x4 - core index']
  #allocation1 [shape = 'u32[144,128]{1,0:T(1,128)}', space=vmem, size = 0x12000, scoped, tag = 'internal scratch']
  %s0 = inlined_call_operand.vmem [shape: bf16[16,32], index: 0, kind: input, shape index: {}]
  %s1 = inlined_call_operand.vmem [shape: bf16[32,128], index: 1, kind: input, shape index: {}]
  %s2 = inlined_call_operand.vmem [shape: f32[1,128], index: 2, kind: input, shape index: {}]
  %s3 = inlined_call_operand.vmem [shape: bf16[128,32], index: 3, kind: input, shape index: {}]
  %s4 = inlined_call_operand.vmem [shape: f32[1,32], index: 4, kind: input, shape index: {}]
  %s5 = inlined_call_operand.hbm [shape: f32[16,32], index: 5, kind: output, shape index: {}]
  %s6 = sld [smem:[#allocation0]]
  $region30: #{tpu_custom_call.1} parent=0
    _
  %s8 = ssub.s32 1, %s6
  %s9 = scalar_select 0, %s8, %s6
  $region1: #{tpu_custom_call.1} parent=0
    #allocation2 [shape = 'u8[8192]{0}', space=vmem, size = 0x2000, scoped, tag = 'output window, operand 0, single buffered']
    #allocation3 [shape = 's32[1]{0}', space=sflag, size = 0x4, scoped, tag = 'scoped memory for tpu_custom_call.1']
    %10 = vsyncpa [#allocation3], 0
    // Predicated region
    $region2: #{tpu_custom_call.1} parent=1 // pred_check
      _
    $region3: #{tpu_custom_call.1} parent=1 // pred_check_branch
      %12 = sbr.rel (0) target = $region5
    $region4: #{tpu_custom_call.1} parent=1 // pred_region
      _
    $region5: #{tpu_custom_call.1} parent=1 // pred_fallthru
      _
    // Predicated region
    $region6: #{tpu_custom_call.1} parent=1 // pred_check
      _
    $region7: #{tpu_custom_call.1} parent=1 // pred_check_branch
      %14 = sbr.rel (0) target = $region9
    $region8: #{tpu_custom_call.1} parent=1 // pred_region
      _
    $region9: #{tpu_custom_call.1} parent=1 // pred_fallthru
      _
    // Predicated region
    $region10: #{tpu_custom_call.1} parent=1 // pred_check
      _
    $region11: #{tpu_custom_call.1} parent=1 // pred_check_branch
      %16 = sbr.rel (0) target = $region13
    $region12: #{tpu_custom_call.1} parent=1 // pred_region
      _
    $region13: #{tpu_custom_call.1} parent=1 // pred_fallthru
      _
    // Predicated region
    $region14: #{tpu_custom_call.1} parent=1 // pred_check
      _
    $region15: #{tpu_custom_call.1} parent=1 // pred_check_branch
      %18 = sbr.rel (0) target = $region17
    $region16: #{tpu_custom_call.1} parent=1 // pred_region
      _
    $region17: #{tpu_custom_call.1} parent=1 // pred_fallthru
      _
    // Predicated region
    $region18: #{tpu_custom_call.1} parent=1 // pred_check
      _
    $region19: #{tpu_custom_call.1} parent=1 // pred_check_branch
      %20 = sbr.rel (0) target = $region21
    $region20: #{tpu_custom_call.1} parent=1 // pred_region
      _
    $region21: #{tpu_custom_call.1} parent=1 // pred_fallthru
      _
    %v22 = vld [vmem:[%s0] sm:$0xf]
    %v23 = vld [vmem:[%s0 + $0x4] sm:$0xf]
    %v24 = vld [vmem:[%s1] sm:$0xf]
    %v25 = vld [vmem:[%s1 + $0x4] sm:$0xf]
    %v26 = vld [vmem:[%s1 + $0x8] sm:$0xf]
    %v27 = vld [vmem:[%s1 + $0xc] sm:$0xf]
    %v28 = vld [vmem:[%s2] sm:$0x1]
    %v30 = vlaneseq
    %v31 = vshrl.u32 %v30, 7
    %v32 = vsub.s32 0, %v31
    %v33 = vrot.slane %v28, %v32
    %v37 = vunpack.c.l.b16 %v22
    %v38 = vunpack.c.l.b16 %v23
    %v39 = vpack.c.b16 %v38, %v37
    %v44 = vunpack.c.l.b16 %v24
    %v45 = vunpack.c.l.b16 %v25
    %v46 = vunpack.c.l.b16 %v26
    %v47 = vunpack.c.l.b16 %v27
    %v48 = vpack.c.b16 %v45, %v44
    %v49 = vpack.c.b16 %v47, %v46
    %vm52 = vcmask 261120
    %v54 = vsel %vm52, %v39, 0
    %56 = vmatprep.subr.bf16.mxu0 0
    %57 = vmatpush1.bf16.msra.mxu0 %v48
    %58 = vmatprep.subr.bf16.mxu0 0
    %59 = vmatpush1.bf16.msra.mxu0 %v49
    %60 = vmatprep.subr.bf16.mxu0 0
    %61 = vmatpush1.bf16.msra.mxu0 0
    %62 = vmatprep.subr.bf16.mxu0 0
    %63 = vmatpush1.bf16.msra.mxu0 0
    %64 = vmatprep.subr.bf16.mxu0 0
    %65 = vmatpush1.bf16.msra.mxu0 0
    %66 = vmatprep.subr.bf16.mxu0 0
    %67 = vmatpush1.bf16.msra.mxu0 0
    %68 = vmatprep.subr.bf16.mxu0 0
    %69 = vmatpush1.bf16.msra.mxu0 0
    %70 = vmatprep.subr.bf16.mxu0 0
    %71 = vmatpush1.bf16.msra.mxu0 0
    %72 = vmatprep.subr.bf16.mxu0 0
    %73 = vmatpush1.bf16.msra.mxu0 0
    %74 = vmatprep.subr.bf16.mxu0 0
    %75 = vmatpush1.bf16.msra.mxu0 0
    %76 = vmatprep.subr.bf16.mxu0 0
    %77 = vmatpush1.bf16.msra.mxu0 0
    %78 = vmatprep.subr.bf16.mxu0 0
    %79 = vmatpush1.bf16.msra.mxu0 0
    %80 = vmatprep.subr.bf16.mxu0 0
    %81 = vmatpush1.bf16.msra.mxu0 0
    %82 = vmatprep.subr.bf16.mxu0 0
    %83 = vmatpush1.bf16.msra.mxu0 0
    %84 = vmatprep.subr.bf16.mxu0 0
    %85 = vmatpush1.bf16.msra.mxu0 0
    %86 = vmatprep.subr.bf16.mxu0 0
    %87 = vmatpush1.bf16.msra.mxu0 0
    %88 = vmatprep.mubr.bf16.mxu0 0
    %89 = vmatmul.mubr.bf16.gmra.mrb[0].mxu0 %v54
    %v90 = vpop.f32.mrb[0].mxu0
    %v91 = vadd.f32 %v33, %v90
    %v92 = vpop.f32.mrb[0].mxu0
    %v93 = vpop.f32.mrb[0].mxu0
    %v94 = vadd.f32 %v33, %v93
    %v95 = vpop.f32.mrb[0].mxu0
    %96 = vdwg.mxu0
    %v97 = vmul.f32 %v91, 0.5
    %v98 = vmul.f32 %v94, 0.5
    %v99 = vmul.f32 %v91, 0.70710677
    %v100 = vmul.f32 %v94, 0.70710677
    %v101 = verf.f32.pop %v99
    %v102 = verf.f32.pop %v100
    %v103 = vadd.f32 %v101, 1.0
    %v104 = vadd.f32 %v102, 1.0
    %v105 = vmul.f32 %v97, %v103
    %v106 = vmul.f32 %v98, %v104
    %v107 = vpack.c.bf16 %v106, %v105
    %v108 = vld [vmem:[%s3] sm:$0xf]
    %v109 = vld [vmem:[%s3 + $0x4] sm:$0xf]
    %v110 = vld [vmem:[%s3 + $0x8] sm:$0xf]
    %v111 = vld [vmem:[%s3 + $0xc] sm:$0xf]
    %v112 = vld [vmem:[%s3 + $0x10] sm:$0xf]
    %v113 = vld [vmem:[%s3 + $0x14] sm:$0xf]
    %v114 = vld [vmem:[%s3 + $0x18] sm:$0xf]
    %v115 = vld [vmem:[%s3 + $0x1c] sm:$0xf]
    %v116 = vld [vmem:[%s3 + $0x20] sm:$0xf]
    %v117 = vld [vmem:[%s3 + $0x24] sm:$0xf]
    %v118 = vld [vmem:[%s3 + $0x28] sm:$0xf]
    %v119 = vld [vmem:[%s3 + $0x2c] sm:$0xf]
    %v120 = vld [vmem:[%s3 + $0x30] sm:$0xf]
    %v121 = vld [vmem:[%s3 + $0x34] sm:$0xf]
    %v122 = vld [vmem:[%s3 + $0x38] sm:$0xf]
    %v123 = vld [vmem:[%s3 + $0x3c] sm:$0xf]
    %v124 = vld [vmem:[%s4] sm:$0x1]
    %v126 = vlaneseq
    %v127 = vshrl.u32 %v126, 7
    %v128 = vsub.s32 0, %v127
    %v129 = vrot.slane %v124, %v128
    %v147 = vunpack.c.l.b16 %v108
    %v148 = vunpack.c.l.b16 %v109
    %v149 = vunpack.c.l.b16 %v110
    %v150 = vunpack.c.l.b16 %v111
    %v151 = vunpack.c.l.b16 %v112
    %v152 = vunpack.c.l.b16 %v113
    %v153 = vunpack.c.l.b16 %v114
    %v154 = vunpack.c.l.b16 %v115
    %v155 = vunpack.c.l.b16 %v116
    %v156 = vunpack.c.l.b16 %v117
    %v157 = vunpack.c.l.b16 %v118
    %v158 = vunpack.c.l.b16 %v119
    %v159 = vunpack.c.l.b16 %v120
    %v160 = vunpack.c.l.b16 %v121
    %v161 = vunpack.c.l.b16 %v122
    %v162 = vunpack.c.l.b16 %v123
    %v163 = vpack.c.b16 %v148, %v147
    %v164 = vpack.c.b16 %v150, %v149
    %v165 = vpack.c.b16 %v152, %v151
    %v166 = vpack.c.b16 %v154, %v153
    %v167 = vpack.c.b16 %v156, %v155
    %v168 = vpack.c.b16 %v158, %v157
    %v169 = vpack.c.b16 %v160, %v159
    %v170 = vpack.c.b16 %v162, %v161
    %179 = vmatprep.subr.bf16.mxu0 0
    %180 = vmatpush1.bf16.msra.mxu0 %v163
    %181 = vmatprep.subr.bf16.mxu0 0
    %182 = vmatpush1.bf16.msra.mxu0 %v164
    %183 = vmatprep.subr.bf16.mxu0 0
    %184 = vmatpush1.bf16.msra.mxu0 %v165
    %185 = vmatprep.subr.bf16.mxu0 0
    %186 = vmatpush1.bf16.msra.mxu0 %v166
    %187 = vmatprep.subr.bf16.mxu0 0
    %188 = vmatpush1.bf16.msra.mxu0 %v167
    %189 = vmatprep.subr.bf16.mxu0 0
    %190 = vmatpush1.bf16.msra.mxu0 %v168
    %191 = vmatprep.subr.bf16.mxu0 0
    %192 = vmatpush1.bf16.msra.mxu0 %v169
    %193 = vmatprep.subr.bf16.mxu0 0
    %194 = vmatpush1.bf16.msra.mxu0 %v170
    %195 = vmatprep.subr.bf16.mxu0 0
    %196 = vmatpush1.bf16.msra.mxu0 0
    %197 = vmatprep.subr.bf16.mxu0 0
    %198 = vmatpush1.bf16.msra.mxu0 0
    %199 = vmatprep.subr.bf16.mxu0 0
    %200 = vmatpush1.bf16.msra.mxu0 0
    %201 = vmatprep.subr.bf16.mxu0 0
    %202 = vmatpush1.bf16.msra.mxu0 0
    %203 = vmatprep.subr.bf16.mxu0 0
    %204 = vmatpush1.bf16.msra.mxu0 0
    %205 = vmatprep.subr.bf16.mxu0 0
    %206 = vmatpush1.bf16.msra.mxu0 0
    %207 = vmatprep.subr.bf16.mxu0 0
    %208 = vmatpush1.bf16.msra.mxu0 0
    %209 = vmatprep.subr.bf16.mxu0 0
    %210 = vmatpush1.bf16.msra.mxu0 0
    %211 = vmatprep.mubr.bf16.mxu0 0
    %212 = vmatmul.mubr.bf16.gmra.mrb[0].mxu0 %v107
    %v213 = vpop.f32.mrb[0].mxu0
    %v214 = vadd.f32 %v129, %v213
    %v215 = vpop.f32.mrb[0].mxu0
    %v216 = vpop.f32.mrb[0].mxu0
    %v217 = vadd.f32 %v129, %v216
    %v218 = vpop.f32.mrb[0].mxu0
    %219 = vdwg.mxu0
    %220 = vst.msk [vmem:[#allocation2] sm:$0xff] %vm52, %v214
    %221 = vst.msk [vmem:[#allocation2 + $0x8] sm:$0xff] %vm52, %v217
    // Predicated region
    $region22: #{tpu_custom_call.1} parent=1 // pred_check
      _
    $region23: #{tpu_custom_call.1} parent=1 // pred_check_branch
      %223 = sbr.rel (0) target = $region25
    $region24: #{tpu_custom_call.1} parent=1 // pred_region
      %s225 = ssub.s32 256, 256
      %226 = vsyncadd [#allocation3], %s225
      %s227 = sshll.u32 [#allocation2], 4
      %s228 = int_to_ptr.vmem [resolvable:$true] %s227
      %233 = dma.vmem_to_hbm [thread:$0]  %s228, 256, %s5, [#allocation3], 128, 128, 8
    $region25: #{tpu_custom_call.1} parent=1 // pred_fallthru
      _
    // Predicated region
    $region26: #{tpu_custom_call.1} parent=1 // pred_check
      _
    $region27: #{tpu_custom_call.1} parent=1 // pred_check_branch
      %235 = sbr.rel (0) target = $region29
    $region28: #{tpu_custom_call.1} parent=1 // pred_region
      %236 = dma.done [#allocation3], 256
    $region29: #{tpu_custom_call.1} parent=1 // pred_fallthru
      _
    %237 = vsyncpa [#allocation3], 1

</llo_original>
